<compile_context>
chip_gen: v7x
topology: tpu7x:2x2x1
jax: 0.10.0
libtpu: 0.0.40
codegen_flags: <defaults>
</compile_context>

<pallas_src>
import functools
import math

import jax
import jax.numpy as jnp
from jax import lax
from jax.experimental import pallas as pl
from jax.experimental.pallas import tpu as pltpu

_LANE = 128


def _round_up(n, m):
    return ((n + m - 1) // m) * m


def _sublane_count(dtype):
    # Native sublane packing: f32 -> 8, bf16/f16 -> 16, int8/fp8 -> 32.
    return max(8, 32 // jnp.dtype(dtype).itemsize)


def _acc_dtype(dtype):
    if jnp.issubdtype(dtype, jnp.integer):
        return dtype               # exact integer accumulation (torch semantics)
    return jnp.float32


def _vmem_limits():
    """Generation-aware (vmem_limit_bytes, per-block byte budget)."""
    cap = None
    try:
        cap = getattr(pltpu.get_tpu_info(), "vmem_capacity_bytes", None)
    except Exception:
        cap = None
    if not cap:
        cap = 64 * 1024 * 1024
    if cap >= 128 * 1024 * 1024:                 # v5e / v6e (128 MiB VMEM)
        return 64 * 1024 * 1024, 6 * 1024 * 1024
    return 48 * 1024 * 1024, 4 * 1024 * 1024     # v7x (64 MiB VMEM per TC)


_VMEM_LIMIT, _TILE_BYTES = _vmem_limits()
_MAX_SINGLE_TILE_L = 8192          # widest last-axis scan without a carry


# --------------------------- kernels ---------------------------------------


def _scan_lane_kernel(x_ref, o_ref, *, acc_dtype):
    """Whole scan axis inside one lane tile: inclusive scan along lanes."""
    o_ref[...] = jnp.cumsum(x_ref[...].astype(acc_dtype), axis=-1).astype(o_ref.dtype)


def _scan_lane_carry_kernel(x_ref, o_ref, carry_ref, *, acc_dtype, l_total, tl):
    """Scan axis split over sequential grid axis 1; running prefix in VMEM."""
    k = pl.program_id(1)

    @pl.when(k == 0)
    def _init():
        carry_ref[...] = jnp.zeros_like(carry_ref)

    blk = x_ref[...].astype(acc_dtype)
    if l_total % tl != 0:
        # Final tile is partial: mask OOB lanes in-kernel (no HBM pad/slice)
        # so the in-tile scan / carried prefix never see garbage.
        col = k * tl + lax.broadcasted_iota(jnp.int32, blk.shape, 1)
        blk = jnp.where(col < l_total, blk, jnp.zeros_like(blk))

    out = jnp.cumsum(blk, axis=-1) + carry_ref[...]
    o_ref[...] = out.astype(o_ref.dtype)
    # Last column of the inclusive scan *is* the new running prefix.
    carry_ref[...] = out[:, -1:]


def _scan_sublane_kernel(x_ref, o_ref, *, acc_dtype):
    """Inclusive scan along axis 1 (sublanes) of a (bb, L, tc) block.

    Hillis-Steele log-step shifted adds: exact for integers, pure adds for
    floats (no MXU precision truncation), no per-step triangular matrix.
    """
    blk = x_ref[...].astype(acc_dtype)
    L = blk.shape[1]
    shift = 1
    while shift < L:
        pad = jnp.zeros(blk.shape[:1] + (shift,) + blk.shape[2:], acc_dtype)
        blk = blk + jnp.concatenate([pad, blk[:, :L - shift, :]], axis=1)
        shift *= 2
    o_ref[...] = blk.astype(o_ref.dtype)


# --------------------------- path wrappers ----------------------------------


def _cumsum_last_axis_2d(x2):
    """Inclusive scan along the last axis of a contiguous (R, L) array."""
    R, L = x2.shape
    dtype = x2.dtype
    itemsize = jnp.dtype(dtype).itemsize
    acc_dtype = _acc_dtype(dtype)
    sub = _sublane_count(dtype)
    cost = pl.CostEstimate(flops=int(x2.size), transcendentals=0,
                           bytes_accessed=2 * int(x2.size) * itemsize)

    if L <= _MAX_SINGLE_TILE_L:
        # Whole scan axis in one lane tile: 1-D fully-parallel grid, no carry.
        rows_budget = max(sub, (_TILE_BYTES // (L * itemsize)) // sub * sub)
        if rows_budget >= R:
            tr, grid_r = R, 1
        else:
            tr, grid_r = rows_budget, pl.cdiv(R, rows_budget)
        return pl.pallas_call(
            functools.partial(_scan_lane_kernel, acc_dtype=acc_dtype),
            out_shape=jax.ShapeDtypeStruct((R, L), dtype),
            grid_spec=pltpu.PrefetchScalarGridSpec(
                num_scalar_prefetch=0,
                grid=(grid_r,),
                in_specs=[pl.BlockSpec((tr, L), lambda i: (i, 0))],
                out_specs=pl.BlockSpec((tr, L), lambda i: (i, 0)),
            ),
            compiler_params=pltpu.CompilerParams(
                dimension_semantics=("parallel",),
                vmem_limit_bytes=_VMEM_LIMIT),
            cost_estimate=cost,
        )(x2)

    # Very long scan axis: adaptive lane tile + sequential VMEM carry.
    n_l = pl.cdiv(L, 2048)
    tl = _round_up(pl.cdiv(L, n_l), _LANE)       # padding waste < one 128 chunk
    n_l = pl.cdiv(L, tl)
    rows_budget = max(sub, (_TILE_BYTES // (tl * itemsize)) // sub * sub)
    if rows_budget >= R:
        tr, grid_r = R, 1
    else:
        tr, grid_r = rows_budget, pl.cdiv(R, rows_budget)

    # TODO(synk): if profiling shows exposed DMA along the sequential k axis,
    # add pipeline_mode=pl.Buffered(3) to the input BlockSpec.
    return pl.pallas_call(
        functools.partial(_scan_lane_carry_kernel, acc_dtype=acc_dtype,
                          l_total=L, tl=tl),
        out_shape=jax.ShapeDtypeStruct((R, L), dtype),
        grid_spec=pltpu.PrefetchScalarGridSpec(
            num_scalar_prefetch=0,
            grid=(grid_r, n_l),
            in_specs=[pl.BlockSpec((tr, tl), lambda i, k: (i, k))],
            out_specs=pl.BlockSpec((tr, tl), lambda i, k: (i, k)),
            scratch_shapes=[pltpu.VMEM((tr, 1), acc_dtype)],
        ),
        compiler_params=pltpu.CompilerParams(
            dimension_semantics=("parallel", "arbitrary"),
            vmem_limit_bytes=_VMEM_LIMIT),
        cost_estimate=cost,
    )(x2)


def _cumsum_sublane_3d(x3):
    """Inclusive scan along axis 1 of a contiguous (B, L, C) array."""
    B, L, C = x3.shape
    dtype = x3.dtype
    itemsize = jnp.dtype(dtype).itemsize
    acc_dtype = _acc_dtype(dtype)
    cost = pl.CostEstimate(flops=int(x3.size) * max(1, (L - 1).bit_length()),
                           transcendentals=0,
                           bytes_accessed=2 * int(x3.size) * itemsize)

    max_tc = max(_LANE, _TILE_BYTES // (L * itemsize))
    if C <= max_tc:
        tc, grid_c = C, 1
        bb = max(1, _TILE_BYTES // (L * C * itemsize))
        if bb >= B:
            bb, grid_b = B, 1
        else:
            grid_b = pl.cdiv(B, bb)
    else:
        tc = (max_tc // _LANE) * _LANE           # lane-dense tile over C
        grid_c = pl.cdiv(C, tc)
        bb, grid_b = 1, B

    return pl.pallas_call(
        functools.partial(_scan_sublane_kernel, acc_dtype=acc_dtype),
        out_shape=jax.ShapeDtypeStruct((B, L, C), dtype),
        grid_spec=pltpu.PrefetchScalarGridSpec(
            num_scalar_prefetch=0,
            grid=(grid_b, grid_c),
            in_specs=[pl.BlockSpec((bb, L, tc), lambda b, c: (b, 0, c))],
            out_specs=pl.BlockSpec((bb, L, tc), lambda b, c: (b, 0, c)),
        ),
        compiler_params=pltpu.CompilerParams(
            dimension_semantics=("parallel", "parallel"),
            vmem_limit_bytes=_VMEM_LIMIT),
        cost_estimate=cost,
    )(x3)


# --------------------------- top-level wrapper -------------------------------


@functools.partial(jax.jit, static_argnames=("axis",))
def pallas_cumsum(x, axis):
    ndim = x.ndim
    axis = axis % ndim

    if x.dtype == jnp.bool_:
        # TODO(synk): torch promotes cumsum(bool) to int64; use int32 here.
        x = x.astype(jnp.int32)

    L = x.shape[axis]
    if x.size == 0 or L <= 1:
        return x                                   # cumsum is the identity here

    shape = x.shape
    itemsize = jnp.dtype(x.dtype).itemsize
    B = math.prod(shape[:axis])
    C = math.prod(shape[axis + 1:])

    if C == 1:
        # Scan axis is (effectively) the last axis: free reshape, lane scan.
        return _cumsum_last_axis_2d(x.reshape(B, L)).reshape(shape)

    if L * min(C, _LANE) * itemsize <= _TILE_BYTES:
        # Keep natural layout: contiguous reshape to (B, L, C), scan on the
        # sublane axis. No HBM transpose before/after the kernel.
        return _cumsum_sublane_3d(x.reshape(B, L, C)).reshape(shape)

    # TODO(synk): rare fallback (very long scan axis that is not the last dim):
    # pay one HBM transpose each way and use the tiled lane-carry scan.
    xt = jnp.moveaxis(x, axis, -1)
    out = _cumsum_last_axis_2d(xt.reshape(B * C, L)).reshape(xt.shape)
    return jnp.moveaxis(out, -1, axis)


class TorchCumSumPallas:
    """Pallas mirror of onnx2torch TorchCumSum: cumulative sum along a fixed axis."""

    def __init__(self, axis):
        self.axis = axis

    def __call__(self, x):
        return pallas_cumsum(x, axis=self.axis)


if __name__ == "__main__":
    key = jax.random.PRNGKey(0)
    k0, k1, k2, k3 = jax.random.split(key, 4)

    # 1) NCHW-style input, scan over H (axis=2): sublane path in natural
    #    layout, single (8,16,16) block, no HBM transpose.
    x = jax.random.normal(k0, (2, 4, 16, 16), dtype=jnp.float32)
    module = TorchCumSumPallas(axis=2)
    y = jax.block_until_ready(module(x))
    y_ref = jnp.cumsum(x, axis=2)
    assert y.shape == x.shape and y.dtype == x.dtype
    assert jnp.allclose(y, y_ref, atol=1e-4, rtol=1e-4)

    # 2) Last-axis scan, whole axis in one lane tile (fully parallel grid).
    #    Integer-valued floats -> both computations exact -> exact compare.
    xb = jnp.round(jax.random.normal(k1, (4, 8, 256), dtype=jnp.float32) * 4.0)
    yb = jax.block_until_ready(TorchCumSumPallas(axis=-1)(xb))
    assert jnp.array_equal(yb, jnp.cumsum(xb, axis=-1))

    # 3) Very long last-axis scan: adaptive lane tiles + sequential VMEM carry
    #    (exercises the partial final tile with in-kernel masking).
    xc = jnp.round(jax.random.normal(k2, (3, 20000), dtype=jnp.float32) * 2.0)
    yc = jax.block_until_ready(TorchCumSumPallas(axis=1)(xc))
    assert jnp.array_equal(yc, jnp.cumsum(xc, axis=1))

    # 4) Integer input, non-last scan axis: exact add-based sublane scan.
    xd = jax.random.randint(k3, (2, 4, 16, 32), minval=-5, maxval=6, dtype=jnp.int32)
    yd = jax.block_until_ready(TorchCumSumPallas(axis=1)(xd))
    assert yd.dtype == xd.dtype
    assert jnp.array_equal(yd, jnp.cumsum(xd, axis=1))

    print("KERNEL_OK")
</pallas_src>

<mosaic_0001>
module attributes {stable_mosaic.version = 11 : i64} {
  func.func @_scan_sublane_kernel(%arg0: i32, %arg1: i32, %arg2: memref<8x16x16xf32, #tpu.memory_space<vmem>>, %arg3: memref<8x16x16xf32, #tpu.memory_space<vmem>>) attributes {dimension_semantics = [#tpu.dimension_semantics<parallel>, #tpu.dimension_semantics<parallel>], iteration_bounds = array<i64: 1, 1>, scalar_prefetch = 0 : i64, scratch_operands = 0 : i64, tpu.core_type = #tpu.core_type<tc>, window_params = [{transform_indices = @transform_0, window_bounds = array<i64: 8, 16, 16>}, {transform_indices = @transform_1, window_bounds = array<i64: 8, 16, 16>}]} {
    %c0 = arith.constant 0 : index
    %c0_0 = arith.constant 0 : index
    %c0_1 = arith.constant 0 : index
    %0 = vector.load %arg2[%c0, %c0_0, %c0_1] : memref<8x16x16xf32, #tpu.memory_space<vmem>>, vector<8x16x16xf32>
    %cst = arith.constant 0.000000e+00 : f32
    %1 = vector.broadcast %cst : f32 to vector<8x1x16xf32>
    %2 = vector.extract_strided_slice %0 {offsets = [0, 0, 0], sizes = [8, 15, 16], strides = [1, 1, 1]} : vector<8x16x16xf32> to vector<8x15x16xf32>
    %3 = tpu.concatenate %1, %2 in 1 : vector<8x1x16xf32>, vector<8x15x16xf32> -> vector<8x16x16xf32>
    %4 = arith.addf %0, %3 : vector<8x16x16xf32>
    %cst_2 = arith.constant 0.000000e+00 : f32
    %5 = vector.broadcast %cst_2 : f32 to vector<8x2x16xf32>
    %6 = vector.extract_strided_slice %4 {offsets = [0, 0, 0], sizes = [8, 14, 16], strides = [1, 1, 1]} : vector<8x16x16xf32> to vector<8x14x16xf32>
    %7 = tpu.concatenate %5, %6 in 1 : vector<8x2x16xf32>, vector<8x14x16xf32> -> vector<8x16x16xf32>
    %8 = arith.addf %4, %7 : vector<8x16x16xf32>
    %cst_3 = arith.constant 0.000000e+00 : f32
    %9 = vector.broadcast %cst_3 : f32 to vector<8x4x16xf32>
    %10 = vector.extract_strided_slice %8 {offsets = [0, 0, 0], sizes = [8, 12, 16], strides = [1, 1, 1]} : vector<8x16x16xf32> to vector<8x12x16xf32>
    %11 = tpu.concatenate %9, %10 in 1 : vector<8x4x16xf32>, vector<8x12x16xf32> -> vector<8x16x16xf32>
    %12 = arith.addf %8, %11 : vector<8x16x16xf32>
    %cst_4 = arith.constant 0.000000e+00 : f32
    %13 = vector.broadcast %cst_4 : f32 to vector<8x8x16xf32>
    %14 = vector.extract_strided_slice %12 {offsets = [0, 0, 0], sizes = [8, 8, 16], strides = [1, 1, 1]} : vector<8x16x16xf32> to vector<8x8x16xf32>
    %15 = tpu.concatenate %13, %14 in 1 : vector<8x8x16xf32>, vector<8x8x16xf32> -> vector<8x16x16xf32>
    %16 = arith.addf %12, %15 : vector<8x16x16xf32>
    %c0_5 = arith.constant 0 : index
    %c0_6 = arith.constant 0 : index
    %c0_7 = arith.constant 0 : index
    %17 = vector.load %arg3[%c0_5, %c0_6, %c0_7] : memref<8x16x16xf32, #tpu.memory_space<vmem>>, vector<8x16x16xf32>
    tpu.vector_store %arg3[%c0_5, %c0_6, %c0_7], %16 {strides = array<i32>} : memref<8x16x16xf32, #tpu.memory_space<vmem>>, vector<8x16x16xf32>,
    return
  }
  func.func @transform_0(%arg0: i32, %arg1: i32) -> (i32, i32, i32) {
    %c0_i32 = arith.constant 0 : i32
    %c0_i32_0 = arith.constant 0 : i32
    return %arg0, %c0_i32, %arg1 : i32, i32, i32
  }
  func.func @transform_1(%arg0: i32, %arg1: i32) -> (i32, i32, i32) {
    %c0_i32 = arith.constant 0 : i32
    %c0_i32_0 = arith.constant 0 : i32
    return %arg0, %c0_i32, %arg1 : i32, i32, i32
  }
}

</mosaic_0001>

<llo_original>
// kernel: pallas_cumsum.1
$region0: #{pallas_cumsum.1}
  #allocation0 [shape = 'u32[]', space=smem, size = 0x4, offset = 0x4, fixed_abs, tag = 'smem constant byte address 0x4 - core index']
  #allocation1 [shape = 'u32[144,128]{1,0:T(1,128)}', space=vmem, size = 0x12000, scoped, tag = 'internal scratch']
  %s0 = inlined_call_operand.hbm [shape: f32[8,16,16], index: 0, kind: input, shape index: {}]
  %s1 = inlined_call_operand.hbm [shape: f32[8,16,16], index: 1, kind: output, shape index: {}]
  %s2 = sld [smem:[#allocation0]]
  $region18: #{pallas_cumsum.1} parent=0
    _
  %s4 = ssub.s32 1, %s2
  %s5 = scalar_select 0, %s4, %s2
  $region1: #{pallas_cumsum.1} parent=0
    #allocation2 [shape = 'u8[65536]{0}', space=vmem, size = 0x10000, scoped, tag = 'input window, operand 0, single buffered']
    #allocation3 [shape = 's32[1]{0}', space=sflag, size = 0x4, scoped, tag = 'scoped memory for pallas_cumsum.1']
    #allocation4 [shape = 's32[1]{0}', space=sflag, size = 0x4, scoped, tag = 'scoped memory for pallas_cumsum.1']
    #allocation5 [shape = 'u8[65536]{0}', space=vmem, size = 0x10000, scoped, tag = 'output window, operand 0, single buffered']
    %6 = vsyncpa [#allocation3], 0
    %7 = vsyncpa [#allocation4], 0
    // Predicated region
    $region2: #{pallas_cumsum.1} parent=1 // pred_check
      _
    $region3: #{pallas_cumsum.1} parent=1 // pred_check_branch
      %9 = sbr.rel (0) target = $region5
    $region4: #{pallas_cumsum.1} parent=1 // pred_region
      %s11 = ssub.s32 2048, 2048
      %12 = vsyncadd [#allocation3], %s11
      %s13 = sshll.u32 [#allocation2], 4
      %s14 = int_to_ptr.vmem [resolvable:$true] %s13
      %19 = dma.hbm_to_vmem [thread:$0]  %s0, 2048, %s14, [#allocation3], 128, 128, 8
    $region5: #{pallas_cumsum.1} parent=1 // pred_fallthru
      _
    // Predicated region
    $region6: #{pallas_cumsum.1} parent=1 // pred_check
      _
    $region7: #{pallas_cumsum.1} parent=1 // pred_check_branch
      %21 = sbr.rel (0) target = $region9
    $region8: #{pallas_cumsum.1} parent=1 // pred_region
      %22 = dma.done [#allocation3], 2048
    $region9: #{pallas_cumsum.1} parent=1 // pred_fallthru
      _
    %v23 = vld [vmem:[#allocation2] sm:$0xff]
    %v24 = vld [vmem:[#allocation2 + $0x8] sm:$0xff]
    %v25 = vld [vmem:[#allocation2 + $0x10] sm:$0xff]
    %v26 = vld [vmem:[#allocation2 + $0x18] sm:$0xff]
    %v27 = vld [vmem:[#allocation2 + $0x20] sm:$0xff]
    %v28 = vld [vmem:[#allocation2 + $0x28] sm:$0xff]
    %v29 = vld [vmem:[#allocation2 + $0x30] sm:$0xff]
    %v30 = vld [vmem:[#allocation2 + $0x38] sm:$0xff]
    %v31 = vld [vmem:[#allocation2 + $0x40] sm:$0xff]
    %v32 = vld [vmem:[#allocation2 + $0x48] sm:$0xff]
    %v33 = vld [vmem:[#allocation2 + $0x50] sm:$0xff]
    %v34 = vld [vmem:[#allocation2 + $0x58] sm:$0xff]
    %v35 = vld [vmem:[#allocation2 + $0x60] sm:$0xff]
    %v36 = vld [vmem:[#allocation2 + $0x68] sm:$0xff]
    %v37 = vld [vmem:[#allocation2 + $0x70] sm:$0xff]
    %v38 = vld [vmem:[#allocation2 + $0x78] sm:$0xff]
    %vm55 = vcmask 1040384
    %v56 = vrot.slane %v23, 7
    %v57 = vrot.slane %v24, 7
    %v58 = vsel %vm55, %v56, %v57
    %v59 = vrot.slane %v25, 7
    %v60 = vrot.slane %v26, 7
    %v61 = vsel %vm55, %v59, %v60
    %v62 = vrot.slane %v27, 7
    %v63 = vrot.slane %v28, 7
    %v64 = vsel %vm55, %v62, %v63
    %v65 = vrot.slane %v29, 7
    %v66 = vrot.slane %v30, 7
    %v67 = vsel %vm55, %v65, %v66
    %v68 = vrot.slane %v31, 7
    %v69 = vrot.slane %v32, 7
    %v70 = vsel %vm55, %v68, %v69
    %v71 = vrot.slane %v33, 7
    %v72 = vrot.slane %v34, 7
    %v73 = vsel %vm55, %v71, %v72
    %v74 = vrot.slane %v35, 7
    %v75 = vrot.slane %v36, 7
    %v76 = vsel %vm55, %v74, %v75
    %v77 = vrot.slane %v37, 7
    %v78 = vrot.slane %v38, 7
    %v79 = vsel %vm55, %v77, %v78
    %v96 = vsel %vm55, 0.0, %v56
    %v97 = vsel %vm55, 0.0, %v59
    %v98 = vsel %vm55, 0.0, %v62
    %v99 = vsel %vm55, 0.0, %v65
    %v100 = vsel %vm55, 0.0, %v68
    %v101 = vsel %vm55, 0.0, %v71
    %v102 = vsel %vm55, 0.0, %v74
    %v103 = vsel %vm55, 0.0, %v77
    %v104 = vadd.f32 %v23, %v96
    %v105 = vadd.f32 %v24, %v58
    %v106 = vadd.f32 %v25, %v97
    %v107 = vadd.f32 %v26, %v61
    %v108 = vadd.f32 %v27, %v98
    %v109 = vadd.f32 %v28, %v64
    %v110 = vadd.f32 %v29, %v99
    %v111 = vadd.f32 %v30, %v67
    %v112 = vadd.f32 %v31, %v100
    %v113 = vadd.f32 %v32, %v70
    %v114 = vadd.f32 %v33, %v101
    %v115 = vadd.f32 %v34, %v73
    %v116 = vadd.f32 %v35, %v102
    %v117 = vadd.f32 %v36, %v76
    %v118 = vadd.f32 %v37, %v103
    %v119 = vadd.f32 %v38, %v79
    %vm136 = vcmask 1041408
    %v137 = vrot.slane %v104, 6
    %v138 = vrot.slane %v105, 6
    %v139 = vsel %vm136, %v137, %v138
    %v140 = vrot.slane %v106, 6
    %v141 = vrot.slane %v107, 6
    %v142 = vsel %vm136, %v140, %v141
    %v143 = vrot.slane %v108, 6
    %v144 = vrot.slane %v109, 6
    %v145 = vsel %vm136, %v143, %v144
    %v146 = vrot.slane %v110, 6
    %v147 = vrot.slane %v111, 6
    %v148 = vsel %vm136, %v146, %v147
    %v149 = vrot.slane %v112, 6
    %v150 = vrot.slane %v113, 6
    %v151 = vsel %vm136, %v149, %v150
    %v152 = vrot.slane %v114, 6
    %v153 = vrot.slane %v115, 6
    %v154 = vsel %vm136, %v152, %v153
    %v155 = vrot.slane %v116, 6
    %v156 = vrot.slane %v117, 6
    %v157 = vsel %vm136, %v155, %v156
    %v158 = vrot.slane %v118, 6
    %v159 = vrot.slane %v119, 6
    %v160 = vsel %vm136, %v158, %v159
    %v177 = vsel %vm136, 0.0, %v137
    %v178 = vsel %vm136, 0.0, %v140
    %v179 = vsel %vm136, 0.0, %v143
    %v180 = vsel %vm136, 0.0, %v146
    %v181 = vsel %vm136, 0.0, %v149
    %v182 = vsel %vm136, 0.0, %v152
    %v183 = vsel %vm136, 0.0, %v155
    %v184 = vsel %vm136, 0.0, %v158
    %v185 = vadd.f32 %v104, %v177
    %v186 = vadd.f32 %v105, %v139
    %v187 = vadd.f32 %v106, %v178
    %v188 = vadd.f32 %v107, %v142
    %v189 = vadd.f32 %v108, %v179
    %v190 = vadd.f32 %v109, %v145
    %v191 = vadd.f32 %v110, %v180
    %v192 = vadd.f32 %v111, %v148
    %v193 = vadd.f32 %v112, %v181
    %v194 = vadd.f32 %v113, %v151
    %v195 = vadd.f32 %v114, %v182
    %v196 = vadd.f32 %v115, %v154
    %v197 = vadd.f32 %v116, %v183
    %v198 = vadd.f32 %v117, %v157
    %v199 = vadd.f32 %v118, %v184
    %v200 = vadd.f32 %v119, %v160
    %vm217 = vcmask 1043456
    %v218 = vrot.slane %v185, 4
    %v219 = vrot.slane %v186, 4
    %v220 = vsel %vm217, %v218, %v219
    %v221 = vrot.slane %v187, 4
    %v222 = vrot.slane %v188, 4
    %v223 = vsel %vm217, %v221, %v222
    %v224 = vrot.slane %v189, 4
    %v225 = vrot.slane %v190, 4
    %v226 = vsel %vm217, %v224, %v225
    %v227 = vrot.slane %v191, 4
    %v228 = vrot.slane %v192, 4
    %v229 = vsel %vm217, %v227, %v228
    %v230 = vrot.slane %v193, 4
    %v231 = vrot.slane %v194, 4
    %v232 = vsel %vm217, %v230, %v231
    %v233 = vrot.slane %v195, 4
    %v234 = vrot.slane %v196, 4
    %v235 = vsel %vm217, %v233, %v234
    %v236 = vrot.slane %v197, 4
    %v237 = vrot.slane %v198, 4
    %v238 = vsel %vm217, %v236, %v237
    %v239 = vrot.slane %v199, 4
    %v240 = vrot.slane %v200, 4
    %v241 = vsel %vm217, %v239, %v240
    %v258 = vsel %vm217, 0.0, %v218
    %v259 = vsel %vm217, 0.0, %v221
    %v260 = vsel %vm217, 0.0, %v224
    %v261 = vsel %vm217, 0.0, %v227
    %v262 = vsel %vm217, 0.0, %v230
    %v263 = vsel %vm217, 0.0, %v233
    %v264 = vsel %vm217, 0.0, %v236
    %v265 = vsel %vm217, 0.0, %v239
    %v266 = vadd.f32 %v185, %v258
    %v267 = vadd.f32 %v186, %v220
    %v268 = vadd.f32 %v187, %v259
    %v269 = vadd.f32 %v188, %v223
    %v270 = vadd.f32 %v189, %v260
    %v271 = vadd.f32 %v190, %v226
    %v272 = vadd.f32 %v191, %v261
    %v273 = vadd.f32 %v192, %v229
    %v274 = vadd.f32 %v193, %v262
    %v275 = vadd.f32 %v194, %v232
    %v276 = vadd.f32 %v195, %v263
    %v277 = vadd.f32 %v196, %v235
    %v278 = vadd.f32 %v197, %v264
    %v279 = vadd.f32 %v198, %v238
    %v280 = vadd.f32 %v199, %v265
    %v281 = vadd.f32 %v200, %v241
    %v282 = vadd.f32 %v266, 0.0
    %v283 = vadd.f32 %v267, %v266
    %v284 = vadd.f32 %v268, 0.0
    %v285 = vadd.f32 %v269, %v268
    %v286 = vadd.f32 %v270, 0.0
    %v287 = vadd.f32 %v271, %v270
    %v288 = vadd.f32 %v272, 0.0
    %v289 = vadd.f32 %v273, %v272
    %v290 = vadd.f32 %v274, 0.0
    %v291 = vadd.f32 %v275, %v274
    %v292 = vadd.f32 %v276, 0.0
    %v293 = vadd.f32 %v277, %v276
    %v294 = vadd.f32 %v278, 0.0
    %v295 = vadd.f32 %v279, %v278
    %v296 = vadd.f32 %v280, 0.0
    %v297 = vadd.f32 %v281, %v280
    %vm298 = vcmask 130048
    %299 = vst.msk [vmem:[#allocation5] sm:$0xff] %vm298, %v282
    %300 = vst.msk [vmem:[#allocation5 + $0x8] sm:$0xff] %vm298, %v283
    %301 = vst.msk [vmem:[#allocation5 + $0x10] sm:$0xff] %vm298, %v284
    %302 = vst.msk [vmem:[#allocation5 + $0x18] sm:$0xff] %vm298, %v285
    %303 = vst.msk [vmem:[#allocation5 + $0x20] sm:$0xff] %vm298, %v286
    %304 = vst.msk [vmem:[#allocation5 + $0x28] sm:$0xff] %vm298, %v287
    %305 = vst.msk [vmem:[#allocation5 + $0x30] sm:$0xff] %vm298, %v288
    %306 = vst.msk [vmem:[#allocation5 + $0x38] sm:$0xff] %vm298, %v289
    %307 = vst.msk [vmem:[#allocation5 + $0x40] sm:$0xff] %vm298, %v290
    %308 = vst.msk [vmem:[#allocation5 + $0x48] sm:$0xff] %vm298, %v291
    %309 = vst.msk [vmem:[#allocation5 + $0x50] sm:$0xff] %vm298, %v292
    %310 = vst.msk [vmem:[#allocation5 + $0x58] sm:$0xff] %vm298, %v293
    %311 = vst.msk [vmem:[#allocation5 + $0x60] sm:$0xff] %vm298, %v294
    %312 = vst.msk [vmem:[#allocation5 + $0x68] sm:$0xff] %vm298, %v295
    %313 = vst.msk [vmem:[#allocation5 + $0x70] sm:$0xff] %vm298, %v296
    %314 = vst.msk [vmem:[#allocation5 + $0x78] sm:$0xff] %vm298, %v297
    // Predicated region
    $region10: #{pallas_cumsum.1} parent=1 // pred_check
      _
    $region11: #{pallas_cumsum.1} parent=1 // pred_check_branch
      %316 = sbr.rel (0) target = $region13
    $region12: #{pallas_cumsum.1} parent=1 // pred_region
      %s318 = ssub.s32 2048, 2048
      %319 = vsyncadd [#allocation4], %s318
      %s320 = sshll.u32 [#allocation5], 4
      %s321 = int_to_ptr.vmem [resolvable:$true] %s320
      %326 = dma.vmem_to_hbm [thread:$0]  %s321, 2048, %s1, [#allocation4], 128, 128, 8
    $region13: #{pallas_cumsum.1} parent=1 // pred_fallthru
      _
    // Predicated region
    $region14: #{pallas_cumsum.1} parent=1 // pred_check
      _
    $region15: #{pallas_cumsum.1} parent=1 // pred_check_branch
      %328 = sbr.rel (0) target = $region17
    $region16: #{pallas_cumsum.1} parent=1 // pred_region
      %329 = dma.done [#allocation4], 2048
    $region17: #{pallas_cumsum.1} parent=1 // pred_fallthru
      _
    %330 = vsyncpa [#allocation3], 1
    %331 = vsyncpa [#allocation4], 1

</llo_original>
